<compile_context>
chip_gen: v5e
topology: v5e:2x2
jax: 0.10.0
libtpu: 0.0.40
codegen_flags: <defaults>
</compile_context>

<pallas_src>
import jax
import jax.numpy as jnp
from jax.experimental import pallas as pl
from jax.experimental.pallas import tpu as pltpu


def _round_up(x, m):
    return pl.cdiv(x, m) * m


def _make_kernel(num_layers, compute_dtype):
    """Fused elementwise-product + num_layers-linear MLP + sigmoid kernel."""

    def kernel(*refs):
        xi_ref, xj_ref = refs[0], refs[1]
        o_ref = refs[-1]
        wb_refs = refs[2:-1]

        # Elementwise product in f32 (inputs arrive f32), cast once to bf16
        # right before the first MXU matmul.
        x = (xi_ref[...] * xj_ref[...]).astype(compute_dtype)
        for li in range(num_layers):
            w_ref = wb_refs[2 * li]
            b_ref = wb_refs[2 * li + 1]
            z = jnp.dot(x, w_ref[...], preferred_element_type=jnp.float32)
            z = z + b_ref[...]                                   # bias add in f32
            if li < num_layers - 1:
                x = jnp.maximum(z, 0.0).astype(compute_dtype)    # relu -> bf16
            else:
                o_ref[...] = jax.nn.sigmoid(z).astype(o_ref.dtype)  # f32 sigmoid

    return kernel


def link_predictor(x_i, x_j, params, *, tile_rows=16384,
                   compute_dtype=jnp.bfloat16):
    """params = [(W0, b0), ..., (W_{L-1}, b_{L-1})] with W stored as [in, out]."""
    N, in_ch = x_i.shape
    num_layers = len(params)
    out_ch = params[-1][0].shape[1]
    LANE = 128

    # ---- lane-packing factor: pack p edge rows side-by-side on the 128 lanes ----
    if 0 < in_ch < LANE and LANE % in_ch == 0:
        p = LANE // in_ch        # keep p = 4 for in_ch = 32 (K = N = 128 tiles)
    else:
        p = 1                    # fallback: unpacked path (still correct)

    # ---- block-diagonal packed weights / tiled biases (built once, tiny) ----
    eye_p = jnp.eye(p, dtype=jnp.float32)
    packed_wb = []
    for (w, b) in params:
        if p > 1:
            w = jnp.kron(eye_p, w)            # [p*in, p*out] block-diagonal
            b = jnp.tile(b, p)                # [p*out]
        packed_wb.append((w.astype(compute_dtype),
                          b.astype(jnp.float32).reshape(1, -1)))

    # ---- full VMEM footprint accounting (bytes per packed row + fixed) ----
    in_w = _round_up(p * in_ch, LANE)
    out_w = _round_up(p * out_ch, LANE)                 # lane-padded out buffer
    layer_out_ws = [_round_up(p * w.shape[1], LANE) for (w, _) in params]
    per_row_bytes = (2 * 2 * in_w * 4                   # 2 f32 inputs, double buffered
                     + 2 * out_w * 4                    # f32 output, double buffered
                     + sum(lw * (4 + 2) for lw in layer_out_ws))  # f32 z + bf16 relu temps
    fixed_bytes = 0
    for (w, b) in packed_wb:
        fixed_bytes += 2 * _round_up(w.shape[0], 16) * _round_up(w.shape[1], LANE) * 2
        fixed_bytes += 2 * 8 * _round_up(b.shape[1], LANE) * 4
    fixed_bytes += 1 << 20                              # compiler internal-scratch margin

    # Budget 40 MiB of scoped VMEM: safe on v7x (64 MiB/TC) and leaves room on
    # v5e/v6e (128 MiB physical) once vmem_limit_bytes is raised explicitly.
    VMEM_BUDGET = 40 * 1024 * 1024

    # ---- tile sizing over packed rows ----
    n_packed = pl.cdiv(N, p)
    tile_p = _round_up(max(pl.cdiv(tile_rows, p), 8), 8)
    max_tile_p = max(8, ((VMEM_BUDGET - fixed_bytes) // per_row_bytes) // 8 * 8)
    tile_p = min(tile_p, max_tile_p)
    # Prefer >= 4 grid steps (>= 2 per TensorCore on v7x) when the batch is big
    # enough to benefit; tiny batches stay at 1 step (fixed overhead dominates).
    MIN_STEPS, MIN_TILE_P = 4, 256
    if n_packed >= MIN_STEPS * MIN_TILE_P:
        tile_p = min(tile_p, _round_up(pl.cdiv(n_packed, MIN_STEPS), 8))
    tile_p = max(8, min(tile_p, _round_up(n_packed, 8)))

    n_pad_packed = _round_up(n_packed, tile_p)
    grid = (n_pad_packed // tile_p,)
    n_rows_padded = n_pad_packed * p

    vmem_limit = int(min(64 * 1024 * 1024,
                         max(32 * 1024 * 1024,
                             fixed_bytes + tile_p * per_row_bytes + 8 * 1024 * 1024)))

    # ---- lane-pack the activations: metadata-only reshape, pad only if needed ----
    def pack_rows(x):
        if n_rows_padded != N:
            x = jnp.pad(x, ((0, n_rows_padded - N), (0, 0)))
        return x.reshape(n_pad_packed, p * in_ch)       # f32, no extra HBM copy

    xi_p = pack_rows(x_i)
    xj_p = pack_rows(x_j)

    row_map = lambda i: (i, 0)
    rep_map = lambda i: (0, 0)

    in_specs = [
        pl.BlockSpec((tile_p, p * in_ch), row_map),     # x_i tile (f32)
        pl.BlockSpec((tile_p, p * in_ch), row_map),     # x_j tile (f32)
    ]
    flat_args = [xi_p, xj_p]
    for (w, b) in packed_wb:
        in_specs.append(pl.BlockSpec(w.shape, rep_map))  # resident bf16 weight
        in_specs.append(pl.BlockSpec(b.shape, rep_map))  # resident f32 bias
        flat_args += [w, b]

    # ---- advisory cost estimate for the surrounding XLA schedule ----
    flops = n_rows_padded * in_ch                        # elementwise product
    for (w, _) in packed_wb:
        flops += 2 * n_pad_packed * w.shape[0] * w.shape[1]
    bytes_accessed = (2 * n_rows_padded * in_ch * 4                    # x_i + x_j reads
                      + sum(w.size * 2 + b.size * 4 for (w, b) in packed_wb)
                      + n_pad_packed * p * out_ch * 4)                 # output write
    cost = pl.CostEstimate(flops=int(flops),
                           transcendentals=int(n_pad_packed * p * out_ch),
                           bytes_accessed=int(bytes_accessed))

    out_packed = pl.pallas_call(
        _make_kernel(num_layers, compute_dtype),
        out_shape=jax.ShapeDtypeStruct((n_pad_packed, p * out_ch), jnp.float32),
        grid=grid,
        in_specs=in_specs,
        out_specs=pl.BlockSpec((tile_p, p * out_ch), row_map),
        compiler_params=pltpu.CompilerParams(
            dimension_semantics=("parallel",),
            vmem_limit_bytes=vmem_limit),
        cost_estimate=cost,
    )(*flat_args)

    # Unpack: (n_pad_packed, p*out_ch) -> (n_rows_padded, out_ch) -> drop padding.
    return out_packed.reshape(n_rows_padded, out_ch)[:N]


def init_params(key, in_channels, hidden_channels, out_channels, num_layers):
    """Deterministic init mimicking nn.Linear's uniform(-1/sqrt(fan_in), ...).
    Weights are returned transposed: [in_features, out_features]."""
    dims = [in_channels] + [hidden_channels] * (num_layers - 1) + [out_channels]
    params = []
    for li in range(num_layers):
        fan_in, fan_out = dims[li], dims[li + 1]
        key, kw, kb = jax.random.split(key, 3)
        bound = 1.0 / (fan_in ** 0.5)
        w = jax.random.uniform(kw, (fan_in, fan_out), jnp.float32, -bound, bound)
        b = jax.random.uniform(kb, (fan_out,), jnp.float32, -bound, bound)
        params.append((w, b))
    return params


def reference_forward(x_i, x_j, params):
    x = x_i * x_j
    for (w, b) in params[:-1]:
        x = jnp.maximum(x @ w + b, 0.0)
    w, b = params[-1]
    return jax.nn.sigmoid(x @ w + b)


if __name__ == "__main__":
    # Small shapes consistent with the module: in=32, hidden=32, out=1,
    # num_layers=3, dropout=0.5 (identity in eval), batch(edges)=16.
    in_channels, hidden_channels, out_channels, num_layers = 32, 32, 1, 3
    batch = 16

    key = jax.random.PRNGKey(0)
    k_xi, k_xj, k_p = jax.random.split(key, 3)
    x_i = jax.random.normal(k_xi, (batch, in_channels), jnp.float32)
    x_j = jax.random.normal(k_xj, (batch, in_channels), jnp.float32)
    params = init_params(k_p, in_channels, hidden_channels, out_channels, num_layers)

    out = link_predictor(x_i, x_j, params)
    out = jax.block_until_ready(out)

    ref = reference_forward(x_i, x_j, params)
    assert out.shape == (batch, out_channels), out.shape
    # bf16 weights / bf16 matmul inputs vs f32 reference -> loosened tolerance.
    err = float(jnp.max(jnp.abs(out.astype(jnp.float32) - ref)))
    assert jnp.allclose(out.astype(jnp.float32), ref, atol=2e-2, rtol=2e-2), err

    print("KERNEL_OK")
</pallas_src>

<mosaic_0001>
module attributes {stable_mosaic.version = 11 : i64} {
  func.func @kernel(%arg0: i32, %arg1: memref<8x128xf32, #tpu.memory_space<vmem>>, %arg2: memref<8x128xf32, #tpu.memory_space<vmem>>, %arg3: memref<128x128xbf16, #tpu.memory_space<vmem>>, %arg4: memref<1x128xf32, #tpu.memory_space<vmem>>, %arg5: memref<128x128xbf16, #tpu.memory_space<vmem>>, %arg6: memref<1x128xf32, #tpu.memory_space<vmem>>, %arg7: memref<128x4xbf16, #tpu.memory_space<vmem>>, %arg8: memref<1x4xf32, #tpu.memory_space<vmem>>, %arg9: memref<8x4xf32, #tpu.memory_space<vmem>>) attributes {dimension_semantics = [#tpu.dimension_semantics<parallel>], iteration_bounds = array<i64: 1>, scalar_prefetch = 0 : i64, scratch_operands = 0 : i64, tpu.core_type = #tpu.core_type<tc>, window_params = [{transform_indices = @transform_0, window_bounds = array<i64: 8, 128>}, {transform_indices = @transform_1, window_bounds = array<i64: 8, 128>}, {pipeline_mode = #tpu.pipeline_mode<synchronous>, transform_indices = @transform_2, window_bounds = array<i64: 128, 128>}, {pipeline_mode = #tpu.pipeline_mode<synchronous>, transform_indices = @transform_3, window_bounds = array<i64: 1, 128>}, {pipeline_mode = #tpu.pipeline_mode<synchronous>, transform_indices = @transform_4, window_bounds = array<i64: 128, 128>}, {pipeline_mode = #tpu.pipeline_mode<synchronous>, transform_indices = @transform_5, window_bounds = array<i64: 1, 128>}, {pipeline_mode = #tpu.pipeline_mode<synchronous>, transform_indices = @transform_6, window_bounds = array<i64: 128, 4>}, {pipeline_mode = #tpu.pipeline_mode<synchronous>, transform_indices = @transform_7, window_bounds = array<i64: 1, 4>}, {transform_indices = @transform_8, window_bounds = array<i64: 8, 4>}]} {
    %c0 = arith.constant 0 : index
    %c0_0 = arith.constant 0 : index
    %0 = vector.load %arg1[%c0, %c0_0] : memref<8x128xf32, #tpu.memory_space<vmem>>, vector<8x128xf32>
    %c0_1 = arith.constant 0 : index
    %c0_2 = arith.constant 0 : index
    %1 = vector.load %arg2[%c0_1, %c0_2] : memref<8x128xf32, #tpu.memory_space<vmem>>, vector<8x128xf32>
    %2 = arith.mulf %0, %1 : vector<8x128xf32>
    %3 = arith.truncf %2 : vector<8x128xf32> to vector<8x128xbf16>
    %c0_3 = arith.constant 0 : index
    %c0_4 = arith.constant 0 : index
    %4 = vector.load %arg3[%c0_3, %c0_4] : memref<128x128xbf16, #tpu.memory_space<vmem>>, vector<128x128xbf16>
    %cst = arith.constant dense<0.000000e+00> : vector<8x128xf32>
    %5 = tpu.matmul %3, %4, %cst {dimension_numbers = #tpu.dot_dimension_numbers<[1], [0], [0], [1], [0, 0, 1, 1], [], []>} : vector<8x128xbf16>, vector<128x128xbf16>, vector<8x128xf32> -> vector<8x128xf32>
    %c0_5 = arith.constant 0 : index
    %c0_6 = arith.constant 0 : index
    %6 = vector.load %arg4[%c0_5, %c0_6] : memref<1x128xf32, #tpu.memory_space<vmem>>, vector<1x128xf32>
    %7 = vector.broadcast %6 : vector<1x128xf32> to vector<8x128xf32>
    %8 = arith.addf %5, %7 : vector<8x128xf32>
    %cst_7 = arith.constant 0.000000e+00 : f32
    %9 = vector.broadcast %cst_7 : f32 to vector<8x128xf32>
    %10 = arith.maximumf %8, %9 : vector<8x128xf32>
    %11 = arith.truncf %10 : vector<8x128xf32> to vector<8x128xbf16>
    %c0_8 = arith.constant 0 : index
    %c0_9 = arith.constant 0 : index
    %12 = vector.load %arg5[%c0_8, %c0_9] : memref<128x128xbf16, #tpu.memory_space<vmem>>, vector<128x128xbf16>
    %cst_10 = arith.constant dense<0.000000e+00> : vector<8x128xf32>
    %13 = tpu.matmul %11, %12, %cst_10 {dimension_numbers = #tpu.dot_dimension_numbers<[1], [0], [0], [1], [0, 0, 1, 1], [], []>} : vector<8x128xbf16>, vector<128x128xbf16>, vector<8x128xf32> -> vector<8x128xf32>
    %c0_11 = arith.constant 0 : index
    %c0_12 = arith.constant 0 : index
    %14 = vector.load %arg6[%c0_11, %c0_12] : memref<1x128xf32, #tpu.memory_space<vmem>>, vector<1x128xf32>
    %15 = vector.broadcast %14 : vector<1x128xf32> to vector<8x128xf32>
    %16 = arith.addf %13, %15 : vector<8x128xf32>
    %cst_13 = arith.constant 0.000000e+00 : f32
    %17 = vector.broadcast %cst_13 : f32 to vector<8x128xf32>
    %18 = arith.maximumf %16, %17 : vector<8x128xf32>
    %19 = arith.truncf %18 : vector<8x128xf32> to vector<8x128xbf16>
    %c0_14 = arith.constant 0 : index
    %c0_15 = arith.constant 0 : index
    %20 = vector.load %arg7[%c0_14, %c0_15] : memref<128x4xbf16, #tpu.memory_space<vmem>>, vector<128x4xbf16>
    %cst_16 = arith.constant dense<0.000000e+00> : vector<8x4xf32>
    %21 = tpu.matmul %19, %20, %cst_16 {dimension_numbers = #tpu.dot_dimension_numbers<[1], [0], [0], [1], [0, 0, 1, 1], [], []>} : vector<8x128xbf16>, vector<128x4xbf16>, vector<8x4xf32> -> vector<8x4xf32>
    %c0_17 = arith.constant 0 : index
    %c0_18 = arith.constant 0 : index
    %22 = vector.load %arg8[%c0_17, %c0_18] : memref<1x4xf32, #tpu.memory_space<vmem>>, vector<1x4xf32>
    %23 = vector.broadcast %22 : vector<1x4xf32> to vector<8x4xf32>
    %24 = arith.addf %21, %23 : vector<8x4xf32>
    %25 = arith.negf %24 : vector<8x4xf32>
    %26 = math.exp %25 : vector<8x4xf32>
    %cst_19 = arith.constant 1.000000e+00 : f32
    %27 = vector.broadcast %cst_19 : f32 to vector<8x4xf32>
    %28 = arith.addf %27, %26 : vector<8x4xf32>
    %29 = arith.divf %27, %28 : vector<8x4xf32>
    %c0_20 = arith.constant 0 : index
    %c0_21 = arith.constant 0 : index
    %30 = vector.load %arg9[%c0_20, %c0_21] : memref<8x4xf32, #tpu.memory_space<vmem>>, vector<8x4xf32>
    tpu.vector_store %arg9[%c0_20, %c0_21], %29 {strides = array<i32>} : memref<8x4xf32, #tpu.memory_space<vmem>>, vector<8x4xf32>,
    return
  }
  func.func @transform_0(%arg0: i32) -> (i32, i32) {
    %c0_i32 = arith.constant 0 : i32
    %c0_i32_0 = arith.constant 0 : i32
    return %arg0, %c0_i32 : i32, i32
  }
  func.func @transform_1(%arg0: i32) -> (i32, i32) {
    %c0_i32 = arith.constant 0 : i32
    %c0_i32_0 = arith.constant 0 : i32
    return %arg0, %c0_i32 : i32, i32
  }
  func.func @transform_2(%arg0: i32) -> (i32, i32) {
    %c0_i32 = arith.constant 0 : i32
    %c0_i32_0 = arith.constant 0 : i32
    %c0_i32_1 = arith.constant 0 : i32
    return %c0_i32, %c0_i32_0 : i32, i32
  }
  func.func @transform_3(%arg0: i32) -> (i32, i32) {
    %c0_i32 = arith.constant 0 : i32
    %c0_i32_0 = arith.constant 0 : i32
    %c0_i32_1 = arith.constant 0 : i32
    return %c0_i32, %c0_i32_0 : i32, i32
  }
  func.func @transform_4(%arg0: i32) -> (i32, i32) {
    %c0_i32 = arith.constant 0 : i32
    %c0_i32_0 = arith.constant 0 : i32
    %c0_i32_1 = arith.constant 0 : i32
    return %c0_i32, %c0_i32_0 : i32, i32
  }
  func.func @transform_5(%arg0: i32) -> (i32, i32) {
    %c0_i32 = arith.constant 0 : i32
    %c0_i32_0 = arith.constant 0 : i32
    %c0_i32_1 = arith.constant 0 : i32
    return %c0_i32, %c0_i32_0 : i32, i32
  }
  func.func @transform_6(%arg0: i32) -> (i32, i32) {
    %c0_i32 = arith.constant 0 : i32
    %c0_i32_0 = arith.constant 0 : i32
    %c0_i32_1 = arith.constant 0 : i32
    return %c0_i32, %c0_i32_0 : i32, i32
  }
  func.func @transform_7(%arg0: i32) -> (i32, i32) {
    %c0_i32 = arith.constant 0 : i32
    %c0_i32_0 = arith.constant 0 : i32
    %c0_i32_1 = arith.constant 0 : i32
    return %c0_i32, %c0_i32_0 : i32, i32
  }
  func.func @transform_8(%arg0: i32) -> (i32, i32) {
    %c0_i32 = arith.constant 0 : i32
    %c0_i32_0 = arith.constant 0 : i32
    return %arg0, %c0_i32 : i32, i32
  }
}

</mosaic_0001>

<llo_original>
// kernel: tpu_custom_call.1
$region0: #{tpu_custom_call.1}
  #allocation0 [shape = 'u32[]', space=smem, size = 0x4, offset = 0x4, fixed_abs, tag = 'smem constant byte address 0x4 - core index']
  #allocation1 [shape = 'u32[72,128]{1,0:T(1,128)}', space=vmem, size = 0x9000, scoped, tag = 'internal scratch']
  %s0 = inlined_call_operand.hbm [shape: f32[8,128], index: 0, kind: input, shape index: {}]
  %s1 = inlined_call_operand.hbm [shape: f32[8,128], index: 1, kind: input, shape index: {}]
  %s2 = inlined_call_operand.vmem [shape: bf16[128,128], index: 2, kind: input, shape index: {}]
  %s3 = inlined_call_operand.vmem [shape: f32[1,128], index: 3, kind: input, shape index: {}]
  %s4 = inlined_call_operand.hbm [shape: bf16[128,128], index: 4, kind: input, shape index: {}]
  %s5 = inlined_call_operand.vmem [shape: f32[1,128], index: 5, kind: input, shape index: {}]
  %s6 = inlined_call_operand.vmem [shape: bf16[128,4], index: 6, kind: input, shape index: {}]
  %s7 = inlined_call_operand.vmem [shape: f32[1,4], index: 7, kind: input, shape index: {}]
  %s8 = inlined_call_operand.vmem [shape: f32[8,4], index: 8, kind: output, shape index: {}]
  %s9 = sld [smem:[#allocation0]]
  $region54: #{tpu_custom_call.1} parent=0
    _
  %s11 = ssub.s32 1, %s9
  %s12 = scalar_select 0, %s11, %s9
  $region1: #{tpu_custom_call.1} parent=0
    #allocation2 [shape = 'u8[4096]{0}', space=vmem, size = 0x1000, scoped, tag = 'input window, operand 0, single buffered']
    #allocation3 [shape = 's32[1]{0}', space=sflag, size = 0x4, scoped, tag = 'scoped memory for tpu_custom_call.1']
    #allocation4 [shape = 'u8[4096]{0}', space=vmem, size = 0x1000, scoped, tag = 'input window, operand 1, single buffered']
    #allocation5 [shape = 's32[1]{0}', space=sflag, size = 0x4, scoped, tag = 'scoped memory for tpu_custom_call.1']
    #allocation6 [shape = 'u8[32768]{0}', space=vmem, size = 0x8000, scoped, tag = 'input window, operand 4, single buffered']
    %13 = vsyncpa [#allocation3], 0
    %14 = vsyncpa [#allocation5], 0
    // Predicated region
    $region2: #{tpu_custom_call.1} parent=1 // pred_check
      _
    $region3: #{tpu_custom_call.1} parent=1 // pred_check_branch
      %16 = sbr.rel (0) target = $region5
    $region4: #{tpu_custom_call.1} parent=1 // pred_region
      %18 = vsyncadd [#allocation3], 0
      %s20 = sshll.u32 %s0, 4
      %s21 = int_to_ptr.hbm [resolvable:$true] %s20
      %s22 = sshll.u32 [#allocation2], 4
      %s23 = int_to_ptr.vmem [resolvable:$true] %s22
      %25 = dma.hbm_to_vmem [thread:$0]  %s21, 128, %s23, [#allocation3]
    $region5: #{tpu_custom_call.1} parent=1 // pred_fallthru
      _
    // Predicated region
    $region6: #{tpu_custom_call.1} parent=1 // pred_check
      _
    $region7: #{tpu_custom_call.1} parent=1 // pred_check_branch
      %27 = sbr.rel (0) target = $region9
    $region8: #{tpu_custom_call.1} parent=1 // pred_region
      %29 = vsyncadd [#allocation5], 0
      %s31 = sshll.u32 %s1, 4
      %s32 = int_to_ptr.hbm [resolvable:$true] %s31
      %s33 = sshll.u32 [#allocation4], 4
      %s34 = int_to_ptr.vmem [resolvable:$true] %s33
      %36 = dma.hbm_to_vmem [thread:$0]  %s32, 128, %s34, [#allocation5]
    $region9: #{tpu_custom_call.1} parent=1 // pred_fallthru
      _
    // Predicated region
    $region10: #{tpu_custom_call.1} parent=1 // pred_check
      _
    $region11: #{tpu_custom_call.1} parent=1 // pred_check_branch
      %38 = sbr.rel (0) target = $region13
    $region12: #{tpu_custom_call.1} parent=1 // pred_region
      _
    $region13: #{tpu_custom_call.1} parent=1 // pred_fallthru
      _
    // Predicated region
    $region14: #{tpu_custom_call.1} parent=1 // pred_check
      _
    $region15: #{tpu_custom_call.1} parent=1 // pred_check_branch
      %40 = sbr.rel (0) target = $region17
    $region16: #{tpu_custom_call.1} parent=1 // pred_region
      _
    $region17: #{tpu_custom_call.1} parent=1 // pred_fallthru
      _
    // Predicated region
    $region18: #{tpu_custom_call.1} parent=1 // pred_check
      _
    $region19: #{tpu_custom_call.1} parent=1 // pred_check_branch
      %42 = sbr.rel (0) target = $region21
    $region20: #{tpu_custom_call.1} parent=1 // pred_region
      %44 = vsyncadd [#allocation5], 0
      %s45 = sshll.u32 %s4, 4
      %s46 = int_to_ptr.hbm [resolvable:$true] %s45
      %s47 = sshll.u32 [#allocation6], 4
      %s48 = int_to_ptr.vmem [resolvable:$true] %s47
      %53 = dma.hbm_to_vmem [thread:$0]  %s46, 1024, %s48, [#allocation5], 64, 64, 4
    $region21: #{tpu_custom_call.1} parent=1 // pred_fallthru
      _
    // Predicated region
    $region22: #{tpu_custom_call.1} parent=1 // pred_check
      _
    $region23: #{tpu_custom_call.1} parent=1 // pred_check_branch
      %55 = sbr.rel (0) target = $region25
    $region24: #{tpu_custom_call.1} parent=1 // pred_region
      _
    $region25: #{tpu_custom_call.1} parent=1 // pred_fallthru
      _
    // Predicated region
    $region26: #{tpu_custom_call.1} parent=1 // pred_check
      _
    $region27: #{tpu_custom_call.1} parent=1 // pred_check_branch
      %57 = sbr.rel (0) target = $region29
    $region28: #{tpu_custom_call.1} parent=1 // pred_region
      _
    $region29: #{tpu_custom_call.1} parent=1 // pred_fallthru
      _
    // Predicated region
    $region30: #{tpu_custom_call.1} parent=1 // pred_check
      _
    $region31: #{tpu_custom_call.1} parent=1 // pred_check_branch
      %59 = sbr.rel (0) target = $region33
    $region32: #{tpu_custom_call.1} parent=1 // pred_region
      _
    $region33: #{tpu_custom_call.1} parent=1 // pred_fallthru
      _
    // Predicated region
    $region34: #{tpu_custom_call.1} parent=1 // pred_check
      _
    $region35: #{tpu_custom_call.1} parent=1 // pred_check_branch
      %61 = sbr.rel (0) target = $region37
    $region36: #{tpu_custom_call.1} parent=1 // pred_region
      %63 = dma.done [#allocation3], 128
    $region37: #{tpu_custom_call.1} parent=1 // pred_fallthru
      _
    // Predicated region
    $region38: #{tpu_custom_call.1} parent=1 // pred_check
      _
    $region39: #{tpu_custom_call.1} parent=1 // pred_check_branch
      %65 = sbr.rel (0) target = $region41
    $region40: #{tpu_custom_call.1} parent=1 // pred_region
      %67 = dma.done [#allocation5], 128
    $region41: #{tpu_custom_call.1} parent=1 // pred_fallthru
      _
    // Predicated region
    $region42: #{tpu_custom_call.1} parent=1 // pred_check
      _
    $region43: #{tpu_custom_call.1} parent=1 // pred_check_branch
      %69 = sbr.rel (0) target = $region45
    $region44: #{tpu_custom_call.1} parent=1 // pred_region
      %71 = dma.done [#allocation5], 1024
    $region45: #{tpu_custom_call.1} parent=1 // pred_fallthru
      _
    %v72 = vld [vmem:[#allocation2] sm:$0xff]
    %v73 = vld [vmem:[#allocation4] sm:$0xff]
    %v74 = vmul.f32 %v72, %v73
    %v75 = vpack.c.bf16 %v74, %v74
    %v76 = vld [vmem:[%s2] sm:$0xf]
    %v77 = vld [vmem:[%s2 + $0x4] sm:$0xf]
    %v78 = vld [vmem:[%s2 + $0x8] sm:$0xf]
    %v79 = vld [vmem:[%s2 + $0xc] sm:$0xf]
    %v80 = vld [vmem:[%s2 + $0x10] sm:$0xf]
    %v81 = vld [vmem:[%s2 + $0x14] sm:$0xf]
    %v82 = vld [vmem:[%s2 + $0x18] sm:$0xf]
    %v83 = vld [vmem:[%s2 + $0x1c] sm:$0xf]
    %v84 = vld [vmem:[%s2 + $0x20] sm:$0xf]
    %v85 = vld [vmem:[%s2 + $0x24] sm:$0xf]
    %v86 = vld [vmem:[%s2 + $0x28] sm:$0xf]
    %v87 = vld [vmem:[%s2 + $0x2c] sm:$0xf]
    %v88 = vld [vmem:[%s2 + $0x30] sm:$0xf]
    %v89 = vld [vmem:[%s2 + $0x34] sm:$0xf]
    %v90 = vld [vmem:[%s2 + $0x38] sm:$0xf]
    %v91 = vld [vmem:[%s2 + $0x3c] sm:$0xf]
    %v92 = vld [vmem:[%s3] sm:$0x1]
    %v94 = vperm.slane %v92, 0
    %v112 = vunpack.c.l.b16 %v76
    %v113 = vunpack.c.l.b16 %v77
    %v114 = vunpack.c.l.b16 %v78
    %v115 = vunpack.c.l.b16 %v79
    %v116 = vunpack.c.l.b16 %v80
    %v117 = vunpack.c.l.b16 %v81
    %v118 = vunpack.c.l.b16 %v82
    %v119 = vunpack.c.l.b16 %v83
    %v120 = vunpack.c.l.b16 %v84
    %v121 = vunpack.c.l.b16 %v85
    %v122 = vunpack.c.l.b16 %v86
    %v123 = vunpack.c.l.b16 %v87
    %v124 = vunpack.c.l.b16 %v88
    %v125 = vunpack.c.l.b16 %v89
    %v126 = vunpack.c.l.b16 %v90
    %v127 = vunpack.c.l.b16 %v91
    %v128 = vpack.c.b16 %v113, %v112
    %v129 = vpack.c.b16 %v115, %v114
    %v130 = vpack.c.b16 %v117, %v116
    %v131 = vpack.c.b16 %v119, %v118
    %v132 = vpack.c.b16 %v121, %v120
    %v133 = vpack.c.b16 %v123, %v122
    %v134 = vpack.c.b16 %v125, %v124
    %v135 = vpack.c.b16 %v127, %v126
    %144 = vmatpush.bf16.msra.mxu0 %v135
    %145 = vmatpush.bf16.msra.mxu0 %v134
    %146 = vmatpush.bf16.msra.mxu0 %v133
    %147 = vmatpush.bf16.msra.mxu0 %v132
    %148 = vmatpush.bf16.msra.mxu0 %v131
    %149 = vmatpush.bf16.msra.mxu0 %v130
    %150 = vmatpush.bf16.msra.mxu0 %v129
    %151 = vmatpush.bf16.msra.mxu0 %v128
    %152 = vmatmul.bf16.gmra.mxu0 %v75
    %v153 = vpop.f32.mrf.mxu0
    %v154 = vadd.f32 %v94, %v153
    %v155 = vpop.f32.mrf.mxu0
    %156 = vdwg.mxu0
    %v157 = vmax.f32 %v154, 0.0
    %v158 = vpack.c.bf16 %v157, %v157
    %v159 = vld [vmem:[#allocation6] sm:$0xf]
    %v160 = vld [vmem:[#allocation6 + $0x4] sm:$0xf]
    %v161 = vld [vmem:[#allocation6 + $0x8] sm:$0xf]
    %v162 = vld [vmem:[#allocation6 + $0xc] sm:$0xf]
    %v163 = vld [vmem:[#allocation6 + $0x10] sm:$0xf]
    %v164 = vld [vmem:[#allocation6 + $0x14] sm:$0xf]
    %v165 = vld [vmem:[#allocation6 + $0x18] sm:$0xf]
    %v166 = vld [vmem:[#allocation6 + $0x1c] sm:$0xf]
    %v167 = vld [vmem:[#allocation6 + $0x20] sm:$0xf]
    %v168 = vld [vmem:[#allocation6 + $0x24] sm:$0xf]
    %v169 = vld [vmem:[#allocation6 + $0x28] sm:$0xf]
    %v170 = vld [vmem:[#allocation6 + $0x2c] sm:$0xf]
    %v171 = vld [vmem:[#allocation6 + $0x30] sm:$0xf]
    %v172 = vld [vmem:[#allocation6 + $0x34] sm:$0xf]
    %v173 = vld [vmem:[#allocation6 + $0x38] sm:$0xf]
    %v174 = vld [vmem:[#allocation6 + $0x3c] sm:$0xf]
    %v175 = vld [vmem:[%s5] sm:$0x1]
    %v177 = vperm.slane %v175, 0
    %v195 = vunpack.c.l.b16 %v159
    %v196 = vunpack.c.l.b16 %v160
    %v197 = vunpack.c.l.b16 %v161
    %v198 = vunpack.c.l.b16 %v162
    %v199 = vunpack.c.l.b16 %v163
    %v200 = vunpack.c.l.b16 %v164
    %v201 = vunpack.c.l.b16 %v165
    %v202 = vunpack.c.l.b16 %v166
    %v203 = vunpack.c.l.b16 %v167
    %v204 = vunpack.c.l.b16 %v168
    %v205 = vunpack.c.l.b16 %v169
    %v206 = vunpack.c.l.b16 %v170
    %v207 = vunpack.c.l.b16 %v171
    %v208 = vunpack.c.l.b16 %v172
    %v209 = vunpack.c.l.b16 %v173
    %v210 = vunpack.c.l.b16 %v174
    %v211 = vpack.c.b16 %v196, %v195
    %v212 = vpack.c.b16 %v198, %v197
    %v213 = vpack.c.b16 %v200, %v199
    %v214 = vpack.c.b16 %v202, %v201
    %v215 = vpack.c.b16 %v204, %v203
    %v216 = vpack.c.b16 %v206, %v205
    %v217 = vpack.c.b16 %v208, %v207
    %v218 = vpack.c.b16 %v210, %v209
    %227 = vmatpush.bf16.msra.mxu0 %v218
    %228 = vmatpush.bf16.msra.mxu0 %v217
    %229 = vmatpush.bf16.msra.mxu0 %v216
    %230 = vmatpush.bf16.msra.mxu0 %v215
    %231 = vmatpush.bf16.msra.mxu0 %v214
    %232 = vmatpush.bf16.msra.mxu0 %v213
    %233 = vmatpush.bf16.msra.mxu0 %v212
    %234 = vmatpush.bf16.msra.mxu0 %v211
    %235 = vmatmul.bf16.gmra.mxu0 %v158
    %v236 = vpop.f32.mrf.mxu0
    %v237 = vadd.f32 %v177, %v236
    %v238 = vpop.f32.mrf.mxu0
    %239 = vdwg.mxu0
    %v240 = vmax.f32 %v237, 0.0
    %v241 = vpack.c.bf16 %v240, %v240
    %v242 = vld [vmem:[%s6] sm:$0xf]
    %v243 = vld [vmem:[%s6 + $0x4] sm:$0xf]
    %v244 = vld [vmem:[%s6 + $0x8] sm:$0xf]
    %v245 = vld [vmem:[%s6 + $0xc] sm:$0xf]
    %v246 = vld [vmem:[%s6 + $0x10] sm:$0xf]
    %v247 = vld [vmem:[%s6 + $0x14] sm:$0xf]
    %v248 = vld [vmem:[%s6 + $0x18] sm:$0xf]
    %v249 = vld [vmem:[%s6 + $0x1c] sm:$0xf]
    %v250 = vld [vmem:[%s6 + $0x20] sm:$0xf]
    %v251 = vld [vmem:[%s6 + $0x24] sm:$0xf]
    %v252 = vld [vmem:[%s6 + $0x28] sm:$0xf]
    %v253 = vld [vmem:[%s6 + $0x2c] sm:$0xf]
    %v254 = vld [vmem:[%s6 + $0x30] sm:$0xf]
    %v255 = vld [vmem:[%s6 + $0x34] sm:$0xf]
    %v256 = vld [vmem:[%s6 + $0x38] sm:$0xf]
    %v257 = vld [vmem:[%s6 + $0x3c] sm:$0xf]
    %v258 = vld [vmem:[%s7] sm:$0x1]
    %v260 = vperm.slane %v258, 0
    %v278 = vunpack.c.l.b16 %v242
    %v279 = vunpack.c.l.b16 %v243
    %v280 = vunpack.c.l.b16 %v244
    %v281 = vunpack.c.l.b16 %v245
    %v282 = vunpack.c.l.b16 %v246
    %v283 = vunpack.c.l.b16 %v247
    %v284 = vunpack.c.l.b16 %v248
    %v285 = vunpack.c.l.b16 %v249
    %v286 = vunpack.c.l.b16 %v250
    %v287 = vunpack.c.l.b16 %v251
    %v288 = vunpack.c.l.b16 %v252
    %v289 = vunpack.c.l.b16 %v253
    %v290 = vunpack.c.l.b16 %v254
    %v291 = vunpack.c.l.b16 %v255
    %v292 = vunpack.c.l.b16 %v256
    %v293 = vunpack.c.l.b16 %v257
    %v294 = vpack.c.b16 %v279, %v278
    %v295 = vpack.c.b16 %v281, %v280
    %v296 = vpack.c.b16 %v283, %v282
    %v297 = vpack.c.b16 %v285, %v284
    %v298 = vpack.c.b16 %v287, %v286
    %v299 = vpack.c.b16 %v289, %v288
    %v300 = vpack.c.b16 %v291, %v290
    %v301 = vpack.c.b16 %v293, %v292
    %310 = vmatpush.bf16.msra.mxu0 %v301
    %311 = vmatpush.bf16.msra.mxu0 %v300
    %312 = vmatpush.bf16.msra.mxu0 %v299
    %313 = vmatpush.bf16.msra.mxu0 %v298
    %314 = vmatpush.bf16.msra.mxu0 %v297
    %315 = vmatpush.bf16.msra.mxu0 %v296
    %316 = vmatpush.bf16.msra.mxu0 %v295
    %317 = vmatpush.bf16.msra.mxu0 %v294
    %318 = vmatmul.bf16.gmra.mxu0 %v241
    %v319 = vpop.f32.mrf.mxu0
    %v320 = vadd.f32 %v260, %v319
    %v321 = vpop.f32.mrf.mxu0
    %322 = vdwg.mxu0
    %v323 = vxor.u32 %v320, 2147483648
    %v324 = vmul.f32 %v323, 1.442695
    %v325 = vpow.pop %v324
    %v326 = vadd.f32 %v325, 1.0
    %v327 = vrcp.pop %v326
    %v328 = vmul.f32 %v326, %v327
    %v329 = vsub.f32 1.0, %v328
    %v330 = vmul.f32 %v327, %v329
    %v331 = vadd.f32 %v327, %v330
    %vm332 = vweird.f32 %v326
    %vm333 = vweird.f32 %v327
    %vm334 = vmor %vm332, %vm333
    %v335 = vsel %vm334, %v327, %v331
    %v336 = vand.u32 2147483647, %v326
    %vm337 = vcmp.eq.f32.partialorder %v336, 8.507059e+37
    %v338 = vand.u32 %v326, 2147483648
    %v339 = vor.u32 1.1754944e-38, %v338
    %v340 = vsel %vm337, %v339, %v335
    %v341 = vmul.f32 1.0, %v340
    %vm342 = vcmask 31744
    %343 = vst.msk [vmem:[%s8] sm:$0xff] %vm342, %v341
    // Predicated region
    $region46: #{tpu_custom_call.1} parent=1 // pred_check
      _
    $region47: #{tpu_custom_call.1} parent=1 // pred_check_branch
      %345 = sbr.rel (0) target = $region49
    $region48: #{tpu_custom_call.1} parent=1 // pred_region
      _
    $region49: #{tpu_custom_call.1} parent=1 // pred_fallthru
      _
    // Predicated region
    $region50: #{tpu_custom_call.1} parent=1 // pred_check
      _
    $region51: #{tpu_custom_call.1} parent=1 // pred_check_branch
      %347 = sbr.rel (0) target = $region53
    $region52: #{tpu_custom_call.1} parent=1 // pred_region
      _
    $region53: #{tpu_custom_call.1} parent=1 // pred_fallthru
      _
    %348 = vsyncpa [#allocation3], 1
    %349 = vsyncpa [#allocation5], 1

</llo_original>
